<compile_context>
chip_gen: v6e
topology: v6e:2x2x1
jax: 0.10.0
libtpu: 0.0.40
codegen_flags: <defaults>
</compile_context>

<pallas_src>
import math
import functools

import jax
import jax.numpy as jnp
from jax.experimental import pallas as pl
from jax.experimental.pallas import tpu as pltpu


# ---------------------------------------------------------------------------
# Kernels
# ---------------------------------------------------------------------------
def _pe_add_kernel(x_ref, pe_ref, o_ref):
    # x_ref : (TILE_S, B, D) VMEM,  pe_ref: (TILE_S, 1, D) VMEM (broadcast over B)
    o_ref[...] = (x_ref[...] + pe_ref[...]).astype(o_ref.dtype)


def _pe_add_dropout_kernel(x_ref, pe_ref, bits_ref, o_ref, *, threshold, scale):
    # Inverted dropout: keep w.p. (1 - p), scale kept values by 1/(1 - p).
    # keep <=> uniform uint32 bits >= p * 2^32  (pure integer compare, no casts)
    y = x_ref[...] + pe_ref[...]
    keep = bits_ref[...] >= jnp.uint32(threshold)
    o_ref[...] = jnp.where(keep, y * jnp.float32(scale), 0.0).astype(o_ref.dtype)


# ---------------------------------------------------------------------------
# Parameter (buffer) construction — identical math to the PyTorch __init__
# ---------------------------------------------------------------------------
def make_positional_encoding_table(d_model, max_len=512, dtype=jnp.float32):
    position = jnp.arange(0, max_len, dtype=jnp.float32)[:, None]            # (max_len, 1)
    div_term = jnp.exp(
        jnp.arange(0, d_model, 2, dtype=jnp.float32) * (-math.log(10000.0) / d_model)
    )                                                                         # (d_model/2,)
    pe = jnp.zeros((max_len, d_model), dtype=jnp.float32)
    pe = pe.at[:, 0::2].set(jnp.sin(position * div_term))
    pe = pe.at[:, 1::2].set(jnp.cos(position * div_term))
    # unsqueeze(0).transpose(0, 1) -> (max_len, 1, d_model)
    return pe[:, None, :].astype(dtype)


# ---------------------------------------------------------------------------
# Tile-size heuristic: ~2 MiB per x block (fits 2-buffer pipelining of
# x + bits + out well under the 16 MiB scoped-VMEM default of v5e, and leaves
# lots of headroom on v6e/v7x).
# ---------------------------------------------------------------------------
def _choose_tile_s(S, B, D, itemsize, target_block_bytes=2 << 20):
    row_bytes = max(1, B * D * itemsize)
    tile = max(8, target_block_bytes // row_bytes)
    tile = (int(tile) // 8) * 8          # multiple of 8 sequence rows
    tile = max(1, min(tile, S))
    return tile


# ---------------------------------------------------------------------------
# Wrapper
# ---------------------------------------------------------------------------
def positional_encoding_forward(
    x, pe, *, dropout_p=0.1, training=True, rng_key=None, tile_s=None
):
    """x: (S, B, D); pe: (max_len, 1, D) with max_len >= S; rng_key for dropout."""
    S, B, D = x.shape
    itemsize = jnp.dtype(x.dtype).itemsize
    if tile_s is None:
        tile_s = _choose_tile_s(S, B, D, itemsize)
    tile_s = max(1, min(int(tile_s), S))
    num_tiles = pl.cdiv(S, tile_s)

    x_spec = pl.BlockSpec((tile_s, B, D), lambda i: (i, 0, 0))
    pe_spec = pl.BlockSpec((tile_s, 1, D), lambda i: (i, 0, 0))   # windows the full table
    out_spec = pl.BlockSpec((tile_s, B, D), lambda i: (i, 0, 0))

    common = dict(
        out_shape=jax.ShapeDtypeStruct((S, B, D), x.dtype),
        grid=(num_tiles,),
        out_specs=out_spec,
        compiler_params=pltpu.CompilerParams(dimension_semantics=("parallel",)),
    )

    use_dropout = training and dropout_p > 0.0
    if not use_dropout:
        return pl.pallas_call(
            _pe_add_kernel,
            in_specs=[x_spec, pe_spec],
            cost_estimate=pl.CostEstimate(
                flops=S * B * D,
                transcendentals=0,
                bytes_accessed=(2 * S * B * D + S * D) * itemsize,
            ),
            **common,
        )(x, pe)

    if rng_key is None:
        rng_key = jax.random.PRNGKey(0)
    # Uniform uint32 bits, one per element; consumed tile-by-tile like x.
    bits = jax.random.bits(rng_key, (S, B, D), dtype=jnp.uint32)
    threshold = min(int(round(float(dropout_p) * (1 << 32))), (1 << 32) - 1)
    scale = 1.0 / (1.0 - float(dropout_p))
    kernel = functools.partial(
        _pe_add_dropout_kernel, threshold=threshold, scale=scale
    )
    bits_spec = pl.BlockSpec((tile_s, B, D), lambda i: (i, 0, 0))

    return pl.pallas_call(
        kernel,
        in_specs=[x_spec, pe_spec, bits_spec],
        cost_estimate=pl.CostEstimate(
            flops=3 * S * B * D,
            transcendentals=0,
            bytes_accessed=(3 * S * B * D + S * D) * itemsize,
        ),
        **common,
    )(x, pe, bits)


# ---------------------------------------------------------------------------
# Demo / smoke test
# ---------------------------------------------------------------------------
if __name__ == "__main__":
    d_model = 128            # lane-dense last dim (multiple of 128)
    max_len = 64
    dropout_p = 0.1
    S, B = 16, 4

    key = jax.random.PRNGKey(0)
    k_x, k_drop = jax.random.split(key)
    x = jax.random.normal(k_x, (S, B, d_model), dtype=jnp.float32)
    pe = make_positional_encoding_table(d_model, max_len)
    ref_eval = x + pe[:S]

    # 1) eval mode (dropout disabled): exact match with pure-JAX reference
    out_eval = positional_encoding_forward(
        x, pe, dropout_p=dropout_p, training=False
    )
    jax.block_until_ready(out_eval)
    assert bool(jnp.allclose(out_eval, ref_eval, atol=1e-6)), "eval-mode mismatch"

    # 2) eval mode with a forced small tile -> exercises the multi-step grid path
    out_eval_tiled = positional_encoding_forward(
        x, pe, dropout_p=dropout_p, training=False, tile_s=8
    )
    jax.block_until_ready(out_eval_tiled)
    assert bool(jnp.allclose(out_eval_tiled, ref_eval, atol=1e-6)), "tiled eval mismatch"

    # 3) partial last tile (S not a multiple of tile_s)
    S2 = 12
    x2 = x[:S2]
    out_partial = positional_encoding_forward(
        x2, pe, dropout_p=dropout_p, training=False, tile_s=8
    )
    jax.block_until_ready(out_partial)
    assert bool(jnp.allclose(out_partial, x2 + pe[:S2], atol=1e-6)), "partial-tile mismatch"

    # 4) training mode: every element is either 0 or (x + pe) / (1 - p)
    out_train = positional_encoding_forward(
        x, pe, dropout_p=dropout_p, training=True, rng_key=k_drop, tile_s=8
    )
    jax.block_until_ready(out_train)
    scaled = ref_eval / (1.0 - dropout_p)
    ok = jnp.all(
        jnp.isclose(out_train, 0.0, atol=1e-6)
        | jnp.isclose(out_train, scaled, atol=1e-5, rtol=1e-5)
    )
    assert bool(ok), "train-mode dropout values inconsistent"
    # sanity: not everything was dropped
    assert bool(jnp.any(jnp.abs(out_train) > 0)), "all elements dropped"

    print("KERNEL_OK")
</pallas_src>

<mosaic_0001>
module attributes {stable_mosaic.version = 11 : i64} {
  func.func @_pe_add_kernel(%arg0: i32, %arg1: memref<16x4x128xf32, #tpu.memory_space<vmem>>, %arg2: memref<16x1x128xf32, #tpu.memory_space<vmem>>, %arg3: memref<16x4x128xf32, #tpu.memory_space<vmem>>) attributes {dimension_semantics = [#tpu.dimension_semantics<parallel>], iteration_bounds = array<i64: 1>, scalar_prefetch = 0 : i64, scratch_operands = 0 : i64, tpu.core_type = #tpu.core_type<tc>, window_params = [{transform_indices = @transform_0, window_bounds = array<i64: 16, 4, 128>}, {transform_indices = @transform_1, window_bounds = array<i64: 16, 1, 128>}, {transform_indices = @transform_2, window_bounds = array<i64: 16, 4, 128>}]} {
    %c0 = arith.constant 0 : index
    %c0_0 = arith.constant 0 : index
    %c0_1 = arith.constant 0 : index
    %0 = vector.load %arg1[%c0, %c0_0, %c0_1] : memref<16x4x128xf32, #tpu.memory_space<vmem>>, vector<16x4x128xf32>
    %c0_2 = arith.constant 0 : index
    %c0_3 = arith.constant 0 : index
    %c0_4 = arith.constant 0 : index
    %1 = vector.load %arg2[%c0_2, %c0_3, %c0_4] : memref<16x1x128xf32, #tpu.memory_space<vmem>>, vector<16x1x128xf32>
    %2 = vector.broadcast %1 : vector<16x1x128xf32> to vector<16x4x128xf32>
    %3 = arith.addf %0, %2 : vector<16x4x128xf32>
    %c0_5 = arith.constant 0 : index
    %c0_6 = arith.constant 0 : index
    %c0_7 = arith.constant 0 : index
    %4 = vector.load %arg3[%c0_5, %c0_6, %c0_7] : memref<16x4x128xf32, #tpu.memory_space<vmem>>, vector<16x4x128xf32>
    tpu.vector_store %arg3[%c0_5, %c0_6, %c0_7], %3 {strides = array<i32>} : memref<16x4x128xf32, #tpu.memory_space<vmem>>, vector<16x4x128xf32>,
    return
  }
  func.func @transform_0(%arg0: i32) -> (i32, i32, i32) {
    %c0_i32 = arith.constant 0 : i32
    %c0_i32_0 = arith.constant 0 : i32
    %c0_i32_1 = arith.constant 0 : i32
    return %arg0, %c0_i32, %c0_i32_0 : i32, i32, i32
  }
  func.func @transform_1(%arg0: i32) -> (i32, i32, i32) {
    %c0_i32 = arith.constant 0 : i32
    %c0_i32_0 = arith.constant 0 : i32
    %c0_i32_1 = arith.constant 0 : i32
    return %arg0, %c0_i32, %c0_i32_0 : i32, i32, i32
  }
  func.func @transform_2(%arg0: i32) -> (i32, i32, i32) {
    %c0_i32 = arith.constant 0 : i32
    %c0_i32_0 = arith.constant 0 : i32
    %c0_i32_1 = arith.constant 0 : i32
    return %arg0, %c0_i32, %c0_i32_0 : i32, i32, i32
  }
}

</mosaic_0001>

<llo_original>
// kernel: tpu_custom_call.1
$region0: #{tpu_custom_call.1}
  #allocation0 [shape = 'u32[]', space=smem, size = 0x4, offset = 0x4, fixed_abs, tag = 'smem constant byte address 0x4 - core index']
  #allocation1 [shape = 'u32[144,128]{1,0:T(1,128)}', space=vmem, size = 0x12000, scoped, tag = 'internal scratch']
  %s0 = inlined_call_operand.hbm [shape: f32[16,4,128], index: 0, kind: input, shape index: {}]
  %s1 = inlined_call_operand.hbm [shape: f32[64,1,128], index: 1, kind: input, shape index: {}]
  %s2 = inlined_call_operand.hbm [shape: f32[16,4,128], index: 2, kind: output, shape index: {}]
  %s3 = sld [smem:[#allocation0]]
  $region26: #{tpu_custom_call.1} parent=0
    _
  %s5 = ssub.s32 1, %s3
  %s6 = scalar_select 0, %s5, %s3
  $region1: #{tpu_custom_call.1} parent=0
    #allocation2 [shape = 'u8[32768]{0}', space=vmem, size = 0x8000, scoped, tag = 'input window, operand 0, single buffered']
    #allocation3 [shape = 's32[1]{0}', space=sflag, size = 0x4, scoped, tag = 'scoped memory for tpu_custom_call.1']
    #allocation4 [shape = 's32[1]{0}', space=sflag, size = 0x4, scoped, tag = 'scoped memory for tpu_custom_call.1']
    #allocation5 [shape = 'u8[8192]{0}', space=vmem, size = 0x2000, scoped, tag = 'input window, operand 1, single buffered']
    #allocation6 [shape = 's32[1]{0}', space=sflag, size = 0x4, scoped, tag = 'scoped memory for tpu_custom_call.1']
    #allocation7 [shape = 'u8[32768]{0}', space=vmem, size = 0x8000, scoped, tag = 'output window, operand 0, single buffered']
    %7 = vsyncpa [#allocation3], 0
    %8 = vsyncpa [#allocation6], 0
    %9 = vsyncpa [#allocation4], 0
    // Predicated region
    $region2: #{tpu_custom_call.1} parent=1 // pred_check
      _
    $region3: #{tpu_custom_call.1} parent=1 // pred_check_branch
      %11 = sbr.rel (0) target = $region5
    $region4: #{tpu_custom_call.1} parent=1 // pred_region
      %s13 = ssub.s32 1024, 1024
      %14 = vsyncadd [#allocation3], %s13
      %s15 = sshll.u32 [#allocation2], 4
      %s16 = int_to_ptr.vmem [resolvable:$true] %s15
      %21 = dma.hbm_to_vmem [thread:$0]  %s0, 1024, %s16, [#allocation3], 64, 64, 4
    $region5: #{tpu_custom_call.1} parent=1 // pred_fallthru
      _
    // Predicated region
    $region6: #{tpu_custom_call.1} parent=1 // pred_check
      _
    $region7: #{tpu_custom_call.1} parent=1 // pred_check_branch
      %23 = sbr.rel (0) target = $region9
    $region8: #{tpu_custom_call.1} parent=1 // pred_region
      %s25 = ssub.s32 256, 256
      %26 = vsyncadd [#allocation6], %s25
      %s27 = sshll.u32 [#allocation5], 4
      %s28 = int_to_ptr.vmem [resolvable:$true] %s27
      %33 = dma.hbm_to_vmem [thread:$0]  %s1, 256, %s28, [#allocation6], 16, 16, 1
    $region9: #{tpu_custom_call.1} parent=1 // pred_fallthru
      _
    // Predicated region
    $region10: #{tpu_custom_call.1} parent=1 // pred_check
      _
    $region11: #{tpu_custom_call.1} parent=1 // pred_check_branch
      %35 = sbr.rel (0) target = $region13
    $region12: #{tpu_custom_call.1} parent=1 // pred_region
      %36 = dma.done [#allocation3], 1024
    $region13: #{tpu_custom_call.1} parent=1 // pred_fallthru
      _
    // Predicated region
    $region14: #{tpu_custom_call.1} parent=1 // pred_check
      _
    $region15: #{tpu_custom_call.1} parent=1 // pred_check_branch
      %38 = sbr.rel (0) target = $region17
    $region16: #{tpu_custom_call.1} parent=1 // pred_region
      %39 = dma.done [#allocation6], 256
    $region17: #{tpu_custom_call.1} parent=1 // pred_fallthru
      _
    %v40 = vld [vmem:[#allocation2] sm:$0xf]
    %v41 = vld [vmem:[#allocation2 + $0x4] sm:$0xf]
    %v42 = vld [vmem:[#allocation2 + $0x8] sm:$0xf]
    %v43 = vld [vmem:[#allocation2 + $0xc] sm:$0xf]
    %v44 = vld [vmem:[#allocation2 + $0x10] sm:$0xf]
    %v45 = vld [vmem:[#allocation2 + $0x14] sm:$0xf]
    %v46 = vld [vmem:[#allocation2 + $0x18] sm:$0xf]
    %v47 = vld [vmem:[#allocation2 + $0x1c] sm:$0xf]
    %v48 = vld [vmem:[#allocation2 + $0x20] sm:$0xf]
    %v49 = vld [vmem:[#allocation2 + $0x24] sm:$0xf]
    %v50 = vld [vmem:[#allocation2 + $0x28] sm:$0xf]
    %v51 = vld [vmem:[#allocation2 + $0x2c] sm:$0xf]
    %v52 = vld [vmem:[#allocation2 + $0x30] sm:$0xf]
    %v53 = vld [vmem:[#allocation2 + $0x34] sm:$0xf]
    %v54 = vld [vmem:[#allocation2 + $0x38] sm:$0xf]
    %v55 = vld [vmem:[#allocation2 + $0x3c] sm:$0xf]
    %v56 = vld [vmem:[#allocation5] sm:$0x1]
    %v57 = vld [vmem:[#allocation5 + $0x1] sm:$0x1]
    %v58 = vld [vmem:[#allocation5 + $0x2] sm:$0x1]
    %v59 = vld [vmem:[#allocation5 + $0x3] sm:$0x1]
    %v60 = vld [vmem:[#allocation5 + $0x4] sm:$0x1]
    %v61 = vld [vmem:[#allocation5 + $0x5] sm:$0x1]
    %v62 = vld [vmem:[#allocation5 + $0x6] sm:$0x1]
    %v63 = vld [vmem:[#allocation5 + $0x7] sm:$0x1]
    %v64 = vld [vmem:[#allocation5 + $0x8] sm:$0x1]
    %v65 = vld [vmem:[#allocation5 + $0x9] sm:$0x1]
    %v66 = vld [vmem:[#allocation5 + $0xa] sm:$0x1]
    %v67 = vld [vmem:[#allocation5 + $0xb] sm:$0x1]
    %v68 = vld [vmem:[#allocation5 + $0xc] sm:$0x1]
    %v69 = vld [vmem:[#allocation5 + $0xd] sm:$0x1]
    %v70 = vld [vmem:[#allocation5 + $0xe] sm:$0x1]
    %v71 = vld [vmem:[#allocation5 + $0xf] sm:$0x1]
    %v88 = vlaneseq
    %v89 = vshrl.u32 %v88, 7
    %v90 = vsub.s32 0, %v89
    %v91 = vrot.slane %v56, %v90
    %v92 = vlaneseq
    %v93 = vshrl.u32 %v92, 7
    %v94 = vsub.s32 0, %v93
    %v95 = vrot.slane %v57, %v94
    %v96 = vlaneseq
    %v97 = vshrl.u32 %v96, 7
    %v98 = vsub.s32 0, %v97
    %v99 = vrot.slane %v58, %v98
    %v100 = vlaneseq
    %v101 = vshrl.u32 %v100, 7
    %v102 = vsub.s32 0, %v101
    %v103 = vrot.slane %v59, %v102
    %v104 = vlaneseq
    %v105 = vshrl.u32 %v104, 7
    %v106 = vsub.s32 0, %v105
    %v107 = vrot.slane %v60, %v106
    %v108 = vlaneseq
    %v109 = vshrl.u32 %v108, 7
    %v110 = vsub.s32 0, %v109
    %v111 = vrot.slane %v61, %v110
    %v112 = vlaneseq
    %v113 = vshrl.u32 %v112, 7
    %v114 = vsub.s32 0, %v113
    %v115 = vrot.slane %v62, %v114
    %v116 = vlaneseq
    %v117 = vshrl.u32 %v116, 7
    %v118 = vsub.s32 0, %v117
    %v119 = vrot.slane %v63, %v118
    %v120 = vlaneseq
    %v121 = vshrl.u32 %v120, 7
    %v122 = vsub.s32 0, %v121
    %v123 = vrot.slane %v64, %v122
    %v124 = vlaneseq
    %v125 = vshrl.u32 %v124, 7
    %v126 = vsub.s32 0, %v125
    %v127 = vrot.slane %v65, %v126
    %v128 = vlaneseq
    %v129 = vshrl.u32 %v128, 7
    %v130 = vsub.s32 0, %v129
    %v131 = vrot.slane %v66, %v130
    %v132 = vlaneseq
    %v133 = vshrl.u32 %v132, 7
    %v134 = vsub.s32 0, %v133
    %v135 = vrot.slane %v67, %v134
    %v136 = vlaneseq
    %v137 = vshrl.u32 %v136, 7
    %v138 = vsub.s32 0, %v137
    %v139 = vrot.slane %v68, %v138
    %v140 = vlaneseq
    %v141 = vshrl.u32 %v140, 7
    %v142 = vsub.s32 0, %v141
    %v143 = vrot.slane %v69, %v142
    %v144 = vlaneseq
    %v145 = vshrl.u32 %v144, 7
    %v146 = vsub.s32 0, %v145
    %v147 = vrot.slane %v70, %v146
    %v148 = vlaneseq
    %v149 = vshrl.u32 %v148, 7
    %v150 = vsub.s32 0, %v149
    %v151 = vrot.slane %v71, %v150
    %v168 = vadd.f32 %v40, %v91
    %v169 = vadd.f32 %v41, %v95
    %v170 = vadd.f32 %v42, %v99
    %v171 = vadd.f32 %v43, %v103
    %v172 = vadd.f32 %v44, %v107
    %v173 = vadd.f32 %v45, %v111
    %v174 = vadd.f32 %v46, %v115
    %v175 = vadd.f32 %v47, %v119
    %v176 = vadd.f32 %v48, %v123
    %v177 = vadd.f32 %v49, %v127
    %v178 = vadd.f32 %v50, %v131
    %v179 = vadd.f32 %v51, %v135
    %v180 = vadd.f32 %v52, %v139
    %v181 = vadd.f32 %v53, %v143
    %v182 = vadd.f32 %v54, %v147
    %v183 = vadd.f32 %v55, %v151
    %184 = vst [vmem:[#allocation7] sm:$0xf] %v168
    %185 = vst [vmem:[#allocation7 + $0x4] sm:$0xf] %v169
    %186 = vst [vmem:[#allocation7 + $0x8] sm:$0xf] %v170
    %187 = vst [vmem:[#allocation7 + $0xc] sm:$0xf] %v171
    %188 = vst [vmem:[#allocation7 + $0x10] sm:$0xf] %v172
    %189 = vst [vmem:[#allocation7 + $0x14] sm:$0xf] %v173
    %190 = vst [vmem:[#allocation7 + $0x18] sm:$0xf] %v174
    %191 = vst [vmem:[#allocation7 + $0x1c] sm:$0xf] %v175
    %192 = vst [vmem:[#allocation7 + $0x20] sm:$0xf] %v176
    %193 = vst [vmem:[#allocation7 + $0x24] sm:$0xf] %v177
    %194 = vst [vmem:[#allocation7 + $0x28] sm:$0xf] %v178
    %195 = vst [vmem:[#allocation7 + $0x2c] sm:$0xf] %v179
    %196 = vst [vmem:[#allocation7 + $0x30] sm:$0xf] %v180
    %197 = vst [vmem:[#allocation7 + $0x34] sm:$0xf] %v181
    %198 = vst [vmem:[#allocation7 + $0x38] sm:$0xf] %v182
    %199 = vst [vmem:[#allocation7 + $0x3c] sm:$0xf] %v183
    // Predicated region
    $region18: #{tpu_custom_call.1} parent=1 // pred_check
      _
    $region19: #{tpu_custom_call.1} parent=1 // pred_check_branch
      %201 = sbr.rel (0) target = $region21
    $region20: #{tpu_custom_call.1} parent=1 // pred_region
      %s203 = ssub.s32 1024, 1024
      %204 = vsyncadd [#allocation4], %s203
      %s205 = sshll.u32 [#allocation7], 4
      %s206 = int_to_ptr.vmem [resolvable:$true] %s205
      %211 = dma.vmem_to_hbm [thread:$0]  %s206, 1024, %s2, [#allocation4], 64, 64, 4
    $region21: #{tpu_custom_call.1} parent=1 // pred_fallthru
      _
    // Predicated region
    $region22: #{tpu_custom_call.1} parent=1 // pred_check
      _
    $region23: #{tpu_custom_call.1} parent=1 // pred_check_branch
      %213 = sbr.rel (0) target = $region25
    $region24: #{tpu_custom_call.1} parent=1 // pred_region
      %214 = dma.done [#allocation4], 1024
    $region25: #{tpu_custom_call.1} parent=1 // pred_fallthru
      _
    %215 = vsyncpa [#allocation3], 1
    %216 = vsyncpa [#allocation6], 1
    %217 = vsyncpa [#allocation4], 1

</llo_original>
